<compile_context>
chip_gen: v7x
topology: tpu7x:2x2x1
jax: 0.10.0
libtpu: 0.0.40
codegen_flags: <defaults>
</compile_context>

<pallas_src>
import functools
import math
from typing import NamedTuple

import jax
import jax.numpy as jnp
from jax.experimental import pallas as pl
from jax.experimental.pallas import tpu as pltpu

BETA = 1.0
_VMEM_BUDGET_BYTES = 28 << 20   # target pipeline footprint (safe on v7x: 64 MiB physical)
_VMEM_LIMIT_BYTES = 48 << 20    # raise scoped VMEM (v5e default is only 16 MiB)


def _round_up(x, m):
    return ((x + m - 1) // m) * m


def _pipeline_bytes(tile_b, d_in, d_pad):
    """Rough f32 VMEM footprint: double-buffered x/eps/ft tiles + fused W/b
    (double-buffered by the pipeline) + matmul / KL temporaries."""
    stream = 2 * tile_b * (d_in + 2 * d_pad) * 4
    weight = 2 * (d_in + 1) * (2 * d_pad) * 4
    temps = 4 * tile_b * (2 * d_pad) * 4
    return stream + weight + temps


def _pick_batch_tiling(batch, d_in, d_pad, block_b):
    """Pick (tile_b, b_pad, num_tiles): biggest tile that fits the VMEM budget,
    multiple of 8, and an even tile count when multi-tile (v7x has 2 TCs)."""
    tile_b = max(8, min(_round_up(block_b, 8), _round_up(batch, 8)))
    while tile_b > 8 and _pipeline_bytes(tile_b, d_in, d_pad) > _VMEM_BUDGET_BYTES:
        tile_b -= 8
    b_pad = _round_up(batch, tile_b)
    num_tiles = b_pad // tile_b
    if num_tiles > 1 and num_tiles % 2 == 1:
        num_tiles += 1
        tile_b = _round_up(pl.cdiv(batch, num_tiles), 8)
        b_pad = tile_b * num_tiles
    return tile_b, b_pad, num_tiles


class VIBParams(NamedTuple):
    w_fused: jax.Array   # (d_in, 2*d_pad)  [mean | var] columns, f32
    b_fused: jax.Array   # (1, 2*d_pad)


def make_vib_params(w_mean, b_mean, w_var, b_var):
    """Build the fused, lane-padded (128-multiple) projection operands ONCE.

    Padded var-bias lanes are set to 5 + log(e-1) so that sigma = softplus(b-5)
    equals exactly 1 there, making the padded lanes contribute zero KL — this
    replaces the in-kernel feature-column mask.  Padded mean lanes stay zero.
    """
    d_out, d_in = w_mean.shape
    d_pad = _round_up(d_out, 128)
    f32 = jnp.float32

    w_fused = jnp.zeros((d_in, 2 * d_pad), f32)
    w_fused = w_fused.at[:, :d_out].set(w_mean.T.astype(f32))
    w_fused = w_fused.at[:, d_pad:d_pad + d_out].set(w_var.T.astype(f32))

    pad_bias = 5.0 + math.log(math.e - 1.0)          # softplus(pad_bias - 5) == 1
    b_fused = jnp.full((1, 2 * d_pad), pad_bias, f32)
    b_fused = b_fused.at[0, :d_pad].set(0.0)                       # mean-half pad -> 0
    b_fused = b_fused.at[0, :d_out].set(b_mean.astype(f32))        # real mean bias
    b_fused = b_fused.at[0, d_pad:d_pad + d_out].set(b_var.astype(f32))  # real var bias
    return VIBParams(w_fused, b_fused)


def _vib_kernel(x_ref, w_ref, b_ref, eps_ref, ft_ref, loss_ref, *,
                d_pad, tile_b, valid_rows_last, needs_row_mask):
    # One fused MXU matmul producing [mean | var] side by side.
    proj = jnp.dot(x_ref[...], w_ref[...],
                   preferred_element_type=jnp.float32) + b_ref[...]
    mean = proj[:, :d_pad]          # d_pad is a 128-multiple -> lane-aligned slices
    var = proj[:, d_pad:]

    sigma = jax.nn.softplus(var - 5.0)

    # ft = ft_mean + ft_dist.sample() = mean + (mean + sigma * eps)
    ft_ref[...] = (mean + (mean + sigma * eps_ref[...])).astype(ft_ref.dtype)

    # KL( N(mean, sigma) || N(0, 1) ).  Feature-pad lanes are exactly zero by
    # construction (sigma == 1, mean == 0), so no column mask is needed.
    kl = -jnp.log(sigma) + 0.5 * (sigma * sigma + mean * mean - 1.0)
    loss_ref[...] = jnp.reshape(jnp.sum(kl), (1, 1, 1))

    if needs_row_mask:
        # Only the last tile can contain batch-padding rows; mask them there.
        @pl.when(pl.program_id(0) == pl.num_programs(0) - 1)
        def _():
            row = jax.lax.broadcasted_iota(jnp.int32, (tile_b, d_pad), 0)
            kl_masked = jnp.where(row < valid_rows_last, kl, 0.0)
            loss_ref[...] = jnp.reshape(jnp.sum(kl_masked), (1, 1, 1))


@functools.partial(jax.jit, static_argnames=("d_out", "beta", "block_b"))
def vib_forward(x, eps, params, *, d_out, beta=BETA, block_b=512):
    """x: (B, d_in) f32; eps: (B, d_out) f32 ~ N(0,1); params: VIBParams."""
    f32 = jnp.float32
    B, d_in = x.shape
    d_pad = params.w_fused.shape[1] // 2
    assert params.w_fused.shape[0] == d_in

    tile_b, b_pad, num_tiles = _pick_batch_tiling(B, d_in, d_pad, block_b)
    needs_row_mask = b_pad != B
    valid_rows_last = B - (num_tiles - 1) * tile_b

    # Pad only when actually required (avoid extra whole-array HBM passes).
    x_p = x.astype(f32)
    if b_pad != B:
        x_p = jnp.pad(x_p, ((0, b_pad - B), (0, 0)))
    eps_p = eps.astype(f32)
    if b_pad != B or d_pad != d_out:
        eps_p = jnp.pad(eps_p, ((0, b_pad - B), (0, d_pad - d_out)))

    kernel = functools.partial(
        _vib_kernel, d_pad=d_pad, tile_b=tile_b,
        valid_rows_last=valid_rows_last, needs_row_mask=needs_row_mask)

    ft_p, loss_parts = pl.pallas_call(
        kernel,
        grid=(num_tiles,),
        in_specs=[
            pl.BlockSpec((tile_b, d_in), lambda i: (i, 0)),      # x tile (pipelined)
            pl.BlockSpec((d_in, 2 * d_pad), lambda i: (0, 0)),   # fused W (VMEM-resident)
            pl.BlockSpec((1, 2 * d_pad), lambda i: (0, 0)),      # fused b (VMEM-resident)
            pl.BlockSpec((tile_b, d_pad), lambda i: (i, 0)),     # eps tile (pipelined)
        ],
        out_specs=[
            pl.BlockSpec((tile_b, d_pad), lambda i: (i, 0)),     # ft tile (lane-dense)
            pl.BlockSpec((1, 1, 1), lambda i: (i, 0, 0)),        # per-tile partial KL sum
        ],
        out_shape=[
            jax.ShapeDtypeStruct((b_pad, d_pad), f32),
            jax.ShapeDtypeStruct((num_tiles, 1, 1), f32),
        ],
        compiler_params=pltpu.CompilerParams(
            dimension_semantics=("parallel",),       # independent batch tiles
            vmem_limit_bytes=_VMEM_LIMIT_BYTES,
        ),
    )(x_p, params.w_fused, params.b_fused, eps_p)

    # Slice only when padding was applied (downstream could also consume padded ft).
    ft = ft_p
    if b_pad != B or d_pad != d_out:
        ft = ft_p[:B, :d_out]
    info_loss = jnp.sum(loss_parts) * (beta / B)
    return ft, info_loss


def vib_reference(x, w_mean, b_mean, w_var, b_var, eps, beta=BETA):
    """Pure-JAX reference mirroring the PyTorch training-mode forward."""
    mean = x @ w_mean.T + b_mean
    var = x @ w_var.T + b_var
    sigma = jax.nn.softplus(var - 5.0)
    ft = mean + (mean + sigma * eps)
    kl = -jnp.log(sigma) + 0.5 * (sigma * sigma + mean * mean - 1.0)
    info_loss = jnp.sum(jnp.mean(kl, axis=0)) * beta
    return ft, info_loss


if __name__ == "__main__":
    B, D_IN, D_OUT = 8, 32, 16

    key = jax.random.PRNGKey(0)
    k_x, k_wm, k_wv, k_eps = jax.random.split(key, 4)

    # deterministic parameter init: weight ~ N(0, 0.01), bias = 0 (as in _init_weight)
    x = jax.random.normal(k_x, (B, D_IN), dtype=jnp.float32)
    w_mean = 0.01 * jax.random.normal(k_wm, (D_OUT, D_IN), dtype=jnp.float32)
    b_mean = jnp.zeros((D_OUT,), dtype=jnp.float32)
    w_var = 0.01 * jax.random.normal(k_wv, (D_OUT, D_IN), dtype=jnp.float32)
    b_var = jnp.zeros((D_OUT,), dtype=jnp.float32)
    eps = jax.random.normal(k_eps, (B, D_OUT), dtype=jnp.float32)

    params = make_vib_params(w_mean, b_mean, w_var, b_var)   # built once, reused

    # 1) batch multiple of 8 -> no padding, no row mask
    ft, info_loss = vib_forward(x, eps, params, d_out=D_OUT)
    jax.block_until_ready((ft, info_loss))
    ft_ref, loss_ref = vib_reference(x, w_mean, b_mean, w_var, b_var, eps)
    assert jnp.allclose(ft, ft_ref, atol=1e-5, rtol=1e-5)
    assert jnp.allclose(info_loss, loss_ref, atol=1e-5, rtol=1e-5)

    # 2) batch not a multiple of 8 -> single padded tile, last-tile row mask
    B2 = 9
    x2 = jax.random.normal(k_x, (B2, D_IN), dtype=jnp.float32)
    eps2 = jax.random.normal(k_eps, (B2, D_OUT), dtype=jnp.float32)
    ft2, loss2 = vib_forward(x2, eps2, params, d_out=D_OUT)
    jax.block_until_ready((ft2, loss2))
    ft2_ref, loss2_ref = vib_reference(x2, w_mean, b_mean, w_var, b_var, eps2)
    assert jnp.allclose(ft2, ft2_ref, atol=1e-5, rtol=1e-5)
    assert jnp.allclose(loss2, loss2_ref, atol=1e-5, rtol=1e-5)

    # 3) multi-tile batch (forces the even-tile-count path + masked last tile)
    B3 = 272
    x3 = jax.random.normal(k_x, (B3, D_IN), dtype=jnp.float32)
    eps3 = jax.random.normal(k_eps, (B3, D_OUT), dtype=jnp.float32)
    ft3, loss3 = vib_forward(x3, eps3, params, d_out=D_OUT, block_b=128)
    jax.block_until_ready((ft3, loss3))
    ft3_ref, loss3_ref = vib_reference(x3, w_mean, b_mean, w_var, b_var, eps3)
    assert jnp.allclose(ft3, ft3_ref, atol=1e-5, rtol=1e-5)
    assert jnp.allclose(loss3, loss3_ref, atol=1e-4, rtol=1e-4)

    print("KERNEL_OK")
</pallas_src>

<mosaic_0001>
module attributes {stable_mosaic.version = 11 : i64} {
  func.func @_vib_kernel(%arg0: i32, %arg1: memref<8x32xf32, #tpu.memory_space<vmem>>, %arg2: memref<32x256xf32, #tpu.memory_space<vmem>>, %arg3: memref<1x256xf32, #tpu.memory_space<vmem>>, %arg4: memref<8x128xf32, #tpu.memory_space<vmem>>, %arg5: memref<8x128xf32, #tpu.memory_space<vmem>>, %arg6: memref<1x1x1xf32, #tpu.memory_space<vmem>>) attributes {dimension_semantics = [#tpu.dimension_semantics<parallel>], iteration_bounds = array<i64: 1>, scalar_prefetch = 0 : i64, scratch_operands = 0 : i64, tpu.core_type = #tpu.core_type<tc>, window_params = [{transform_indices = @transform_0, window_bounds = array<i64: 8, 32>}, {pipeline_mode = #tpu.pipeline_mode<synchronous>, transform_indices = @transform_1, window_bounds = array<i64: 32, 256>}, {pipeline_mode = #tpu.pipeline_mode<synchronous>, transform_indices = @transform_2, window_bounds = array<i64: 1, 256>}, {transform_indices = @transform_3, window_bounds = array<i64: 8, 128>}, {transform_indices = @transform_4, window_bounds = array<i64: 8, 128>}, {transform_indices = @transform_5, window_bounds = array<i64: 1, 1, 1>}]} {
    %c0 = arith.constant 0 : index
    %c0_0 = arith.constant 0 : index
    %0 = vector.load %arg1[%c0, %c0_0] : memref<8x32xf32, #tpu.memory_space<vmem>>, vector<8x32xf32>
    %c0_1 = arith.constant 0 : index
    %c0_2 = arith.constant 0 : index
    %1 = vector.load %arg2[%c0_1, %c0_2] : memref<32x256xf32, #tpu.memory_space<vmem>>, vector<32x256xf32>
    %cst = arith.constant dense<0.000000e+00> : vector<8x256xf32>
    %2 = tpu.matmul %0, %1, %cst {dimension_numbers = #tpu.dot_dimension_numbers<[1], [0], [0], [1], [0, 0, 1, 1], [], []>} : vector<8x32xf32>, vector<32x256xf32>, vector<8x256xf32> -> vector<8x256xf32>
    %c0_3 = arith.constant 0 : index
    %c0_4 = arith.constant 0 : index
    %3 = vector.load %arg3[%c0_3, %c0_4] : memref<1x256xf32, #tpu.memory_space<vmem>>, vector<1x256xf32>
    %4 = vector.broadcast %3 : vector<1x256xf32> to vector<8x256xf32>
    %5 = arith.addf %2, %4 : vector<8x256xf32>
    %6 = vector.extract_strided_slice %5 {offsets = [0, 0], sizes = [8, 128], strides = [1, 1]} : vector<8x256xf32> to vector<8x128xf32>
    %7 = vector.extract_strided_slice %5 {offsets = [0, 128], sizes = [8, 128], strides = [1, 1]} : vector<8x256xf32> to vector<8x128xf32>
    %cst_5 = arith.constant 5.000000e+00 : f32
    %8 = vector.broadcast %cst_5 : f32 to vector<8x128xf32>
    %9 = arith.subf %7, %8 : vector<8x128xf32>
    %cst_6 = arith.constant 0.000000e+00 : f32
    %10 = vector.broadcast %cst_6 : f32 to vector<8x128xf32>
    %11 = arith.maximumf %9, %10 : vector<8x128xf32>
    %12 = vector.broadcast %cst_6 : f32 to vector<8x128xf32>
    %13 = arith.subf %9, %12 : vector<8x128xf32>
    %14 = arith.cmpf one, %13, %13 : vector<8x128xf32>
    %15 = vector.broadcast %cst_6 : f32 to vector<8x128xf32>
    %16 = arith.addf %9, %15 : vector<8x128xf32>
    %17 = math.absf %13 : vector<8x128xf32>
    %cst_7 = arith.constant 0.000000e+00 : f32
    %18 = vector.broadcast %cst_7 : f32 to vector<8x128xf32>
    %19 = arith.subf %18, %17 : vector<8x128xf32>
    %20 = math.exp %19 : vector<8x128xf32>
    %21 = math.log1p %20 : vector<8x128xf32>
    %22 = arith.addf %11, %21 : vector<8x128xf32>
    %23 = arith.select %14, %16, %22 : vector<8x128xi1>, vector<8x128xf32>
    %c0_8 = arith.constant 0 : index
    %c0_9 = arith.constant 0 : index
    %24 = vector.load %arg4[%c0_8, %c0_9] : memref<8x128xf32, #tpu.memory_space<vmem>>, vector<8x128xf32>
    %25 = arith.mulf %23, %24 : vector<8x128xf32>
    %26 = arith.addf %6, %25 : vector<8x128xf32>
    %27 = arith.addf %6, %26 : vector<8x128xf32>
    %c0_10 = arith.constant 0 : index
    %c0_11 = arith.constant 0 : index
    %28 = vector.load %arg5[%c0_10, %c0_11] : memref<8x128xf32, #tpu.memory_space<vmem>>, vector<8x128xf32>
    tpu.vector_store %arg5[%c0_10, %c0_11], %27 {strides = array<i32>} : memref<8x128xf32, #tpu.memory_space<vmem>>, vector<8x128xf32>,
    %29 = math.log %23 : vector<8x128xf32>
    %cst_12 = arith.constant 0.000000e+00 : f32
    %30 = vector.broadcast %cst_12 : f32 to vector<8x128xf32>
    %31 = arith.subf %30, %29 : vector<8x128xf32>
    %32 = arith.mulf %23, %23 : vector<8x128xf32>
    %33 = arith.mulf %6, %6 : vector<8x128xf32>
    %34 = arith.addf %32, %33 : vector<8x128xf32>
    %cst_13 = arith.constant 1.000000e+00 : f32
    %35 = vector.broadcast %cst_13 : f32 to vector<8x128xf32>
    %36 = arith.subf %34, %35 : vector<8x128xf32>
    %cst_14 = arith.constant 5.000000e-01 : f32
    %37 = vector.broadcast %cst_14 : f32 to vector<8x128xf32>
    %38 = arith.mulf %37, %36 : vector<8x128xf32>
    %39 = arith.addf %31, %38 : vector<8x128xf32>
    %40 = vector.shape_cast %39 : vector<8x128xf32> to vector<1x8x128xf32>
    %cst_15 = arith.constant dense<0.000000e+00> : vector<1xf32>
    %41 = vector.multi_reduction <add>, %40, %cst_15 [1, 2] : vector<1x8x128xf32> to vector<1xf32>
    %42 = vector.shape_cast %41 : vector<1xf32> to vector<1x1x1xf32>
    %43 = vector.extract %42[0, 0, 0] : f32 from vector<1x1x1xf32>
    %44 = vector.broadcast %43 : f32 to vector<1x1x1xf32>
    %c0_16 = arith.constant 0 : index
    %c0_17 = arith.constant 0 : index
    %c0_18 = arith.constant 0 : index
    %45 = vector.load %arg6[%c0_16, %c0_17, %c0_18] : memref<1x1x1xf32, #tpu.memory_space<vmem>>, vector<1x1x1xf32>
    tpu.vector_store %arg6[%c0_16, %c0_17, %c0_18], %44 {strides = array<i32>} : memref<1x1x1xf32, #tpu.memory_space<vmem>>, vector<1x1x1xf32>,
    return
  }
  func.func @transform_0(%arg0: i32) -> (i32, i32) {
    %c0_i32 = arith.constant 0 : i32
    %c0_i32_0 = arith.constant 0 : i32
    return %arg0, %c0_i32 : i32, i32
  }
  func.func @transform_1(%arg0: i32) -> (i32, i32) {
    %c0_i32 = arith.constant 0 : i32
    %c0_i32_0 = arith.constant 0 : i32
    %c0_i32_1 = arith.constant 0 : i32
    return %c0_i32, %c0_i32_0 : i32, i32
  }
  func.func @transform_2(%arg0: i32) -> (i32, i32) {
    %c0_i32 = arith.constant 0 : i32
    %c0_i32_0 = arith.constant 0 : i32
    %c0_i32_1 = arith.constant 0 : i32
    return %c0_i32, %c0_i32_0 : i32, i32
  }
  func.func @transform_3(%arg0: i32) -> (i32, i32) {
    %c0_i32 = arith.constant 0 : i32
    %c0_i32_0 = arith.constant 0 : i32
    return %arg0, %c0_i32 : i32, i32
  }
  func.func @transform_4(%arg0: i32) -> (i32, i32) {
    %c0_i32 = arith.constant 0 : i32
    %c0_i32_0 = arith.constant 0 : i32
    return %arg0, %c0_i32 : i32, i32
  }
  func.func @transform_5(%arg0: i32) -> (i32, i32, i32) {
    %c0_i32 = arith.constant 0 : i32
    %c0_i32_0 = arith.constant 0 : i32
    %c0_i32_1 = arith.constant 0 : i32
    return %arg0, %c0_i32, %c0_i32_0 : i32, i32, i32
  }
}

</mosaic_0001>

<llo_original>
// kernel: vib_forward.1
$region0: #{vib_forward.1}
  #allocation0 [shape = 'u32[]', space=smem, size = 0x4, offset = 0x4, fixed_abs, tag = 'smem constant byte address 0x4 - core index']
  #allocation1 [shape = 'u32[144,128]{1,0:T(1,128)}', space=vmem, size = 0x12000, scoped, tag = 'internal scratch']
  %s0 = inlined_call_operand.vmem [shape: f32[8,32], index: 0, kind: input, shape index: {}]
  %s1 = inlined_call_operand.hbm [shape: f32[32,256], index: 1, kind: input, shape index: {}]
  %s2 = inlined_call_operand.vmem [shape: f32[1,256], index: 2, kind: input, shape index: {}]
  %s3 = inlined_call_operand.vmem [shape: f32[8,128], index: 3, kind: input, shape index: {}]
  %s4 = inlined_call_operand.hbm [shape: f32[8,128], index: 4, kind: output, shape index: {0}]
  %s5 = inlined_call_operand.hbm [shape: f32[1,1,1], index: 5, kind: output, shape index: {1}]
  %6 = xla_tuple %s4, %s5
  %s7 = sld [smem:[#allocation0]]
  $region38: #{vib_forward.1} parent=0
    _
  %s9 = ssub.s32 1, %s7
  %s10 = scalar_select 0, %s9, %s7
  $region1: #{vib_forward.1} parent=0
    #allocation2 [shape = 'u8[32768]{0}', space=vmem, size = 0x8000, scoped, tag = 'input window, operand 1, single buffered']
    #allocation3 [shape = 's32[1]{0}', space=sflag, size = 0x4, scoped, tag = 'scoped memory for vib_forward.1']
    #allocation4 [shape = 's32[1]{0}', space=sflag, size = 0x4, scoped, tag = 'scoped memory for vib_forward.1']
    #allocation5 [shape = 'u8[4096]{0}', space=vmem, size = 0x1000, scoped, tag = 'output window, operand 0, single buffered']
    #allocation6 [shape = 'u8[512]{0}', space=vmem, size = 0x400, scoped, tag = 'output window, operand 1, single buffered']
    #allocation7 [shape = 's32[1]{0}', space=sflag, size = 0x4, scoped, tag = 'scoped memory for vib_forward.1']
    %11 = vsyncpa [#allocation3], 0
    %12 = vsyncpa [#allocation4], 0
    %13 = vsyncpa [#allocation7], 0
    // Predicated region
    $region2: #{vib_forward.1} parent=1 // pred_check
      _
    $region3: #{vib_forward.1} parent=1 // pred_check_branch
      %15 = sbr.rel (0) target = $region5
    $region4: #{vib_forward.1} parent=1 // pred_region
      _
    $region5: #{vib_forward.1} parent=1 // pred_fallthru
      _
    // Predicated region
    $region6: #{vib_forward.1} parent=1 // pred_check
      _
    $region7: #{vib_forward.1} parent=1 // pred_check_branch
      %17 = sbr.rel (0) target = $region9
    $region8: #{vib_forward.1} parent=1 // pred_region
      %s19 = ssub.s32 1024, 1024
      %20 = vsyncadd [#allocation3], %s19
      %s21 = sshll.u32 [#allocation2], 4
      %s22 = int_to_ptr.vmem [resolvable:$true] %s21
      %27 = dma.hbm_to_vmem [thread:$0]  %s1, 1024, %s22, [#allocation3], 256, 256, 16
    $region9: #{vib_forward.1} parent=1 // pred_fallthru
      _
    // Predicated region
    $region10: #{vib_forward.1} parent=1 // pred_check
      _
    $region11: #{vib_forward.1} parent=1 // pred_check_branch
      %29 = sbr.rel (0) target = $region13
    $region12: #{vib_forward.1} parent=1 // pred_region
      _
    $region13: #{vib_forward.1} parent=1 // pred_fallthru
      _
    // Predicated region
    $region14: #{vib_forward.1} parent=1 // pred_check
      _
    $region15: #{vib_forward.1} parent=1 // pred_check_branch
      %31 = sbr.rel (0) target = $region17
    $region16: #{vib_forward.1} parent=1 // pred_region
      _
    $region17: #{vib_forward.1} parent=1 // pred_fallthru
      _
    // Predicated region
    $region18: #{vib_forward.1} parent=1 // pred_check
      _
    $region19: #{vib_forward.1} parent=1 // pred_check_branch
      %33 = sbr.rel (0) target = $region21
    $region20: #{vib_forward.1} parent=1 // pred_region
      %34 = dma.done [#allocation3], 1024
    $region21: #{vib_forward.1} parent=1 // pred_fallthru
      _
    %v35 = vld [vmem:[%s0] sm:$0xff]
    %v36 = vld [vmem:[#allocation2] sm:$0xff]
    %v37 = vld [vmem:[#allocation2 + $0x8] sm:$0xff]
    %v38 = vld [vmem:[#allocation2 + $0x10] sm:$0xff]
    %v39 = vld [vmem:[#allocation2 + $0x18] sm:$0xff]
    %v40 = vld [vmem:[#allocation2 + $0x20] sm:$0xff]
    %v41 = vld [vmem:[#allocation2 + $0x28] sm:$0xff]
    %v42 = vld [vmem:[#allocation2 + $0x30] sm:$0xff]
    %v43 = vld [vmem:[#allocation2 + $0x38] sm:$0xff]
    %v44 = vld [vmem:[%s2] sm:$0x3]
    %v46 = vlaneseq
    %v47 = vshrl.u32 %v46, 7
    %v48 = vsub.s32 0, %v47
    %v49 = vrot.slane %v44, %v48
    %v50 = vlaneseq
    %v51 = vshrl.u32 %v50, 7
    %v52 = vsub.s32 1, %v51
    %v53 = vrot.slane %v44, %v52
    %vm56 = vcmask 261120
    %v58 = vsel %vm56, %v35, 0
    %60 = vmatprep.subr.mxu0 %v37
    %61 = vmatpush1.msra.mxu0 %v36
    %62 = vmatprep.subr.mxu0 %v39
    %63 = vmatpush1.msra.mxu0 %v38
    %64 = vmatprep.subr.mxu0 %v41
    %65 = vmatpush1.msra.mxu0 %v40
    %66 = vmatprep.subr.mxu0 %v43
    %67 = vmatpush1.msra.mxu0 %v42
    %68 = vmatprep.subr.mxu0 0.0
    %69 = vmatpush1.msra.mxu0 0.0
    %70 = vmatprep.subr.mxu0 0.0
    %71 = vmatpush1.msra.mxu0 0.0
    %72 = vmatprep.subr.mxu0 0.0
    %73 = vmatpush1.msra.mxu0 0.0
    %74 = vmatprep.subr.mxu0 0.0
    %75 = vmatpush1.msra.mxu0 0.0
    %76 = vmatprep.subr.mxu0 0.0
    %77 = vmatpush1.msra.mxu0 0.0
    %78 = vmatprep.subr.mxu0 0.0
    %79 = vmatpush1.msra.mxu0 0.0
    %80 = vmatprep.subr.mxu0 0.0
    %81 = vmatpush1.msra.mxu0 0.0
    %82 = vmatprep.subr.mxu0 0.0
    %83 = vmatpush1.msra.mxu0 0.0
    %84 = vmatprep.subr.mxu0 0.0
    %85 = vmatpush1.msra.mxu0 0.0
    %86 = vmatprep.subr.mxu0 0.0
    %87 = vmatpush1.msra.mxu0 0.0
    %88 = vmatprep.subr.mxu0 0.0
    %89 = vmatpush1.msra.mxu0 0.0
    %90 = vmatprep.subr.mxu0 0.0
    %91 = vmatpush1.msra.mxu0 0.0
    %92 = vmatprep.subr.mxu0 0.0
    %93 = vmatpush1.msra.mxu0 0.0
    %94 = vmatprep.subr.mxu0 0.0
    %95 = vmatpush1.msra.mxu0 0.0
    %96 = vmatprep.subr.mxu0 0.0
    %97 = vmatpush1.msra.mxu0 0.0
    %98 = vmatprep.subr.mxu0 0.0
    %99 = vmatpush1.msra.mxu0 0.0
    %100 = vmatprep.subr.mxu0 0.0
    %101 = vmatpush1.msra.mxu0 0.0
    %102 = vmatprep.subr.mxu0 0.0
    %103 = vmatpush1.msra.mxu0 0.0
    %104 = vmatprep.subr.mxu0 0.0
    %105 = vmatpush1.msra.mxu0 0.0
    %106 = vmatprep.subr.mxu0 0.0
    %107 = vmatpush1.msra.mxu0 0.0
    %108 = vmatprep.subr.mxu0 0.0
    %109 = vmatpush1.msra.mxu0 0.0
    %110 = vmatprep.subr.mxu0 0.0
    %111 = vmatpush1.msra.mxu0 0.0
    %112 = vmatprep.subr.mxu0 0.0
    %113 = vmatpush1.msra.mxu0 0.0
    %114 = vmatprep.subr.mxu0 0.0
    %115 = vmatpush1.msra.mxu0 0.0
    %116 = vmatprep.subr.mxu0 0.0
    %117 = vmatpush1.msra.mxu0 0.0
    %118 = vmatprep.subr.mxu0 0.0
    %119 = vmatpush1.msra.mxu0 0.0
    %120 = vmatprep.subr.mxu0 0.0
    %121 = vmatpush1.msra.mxu0 0.0
    %122 = vmatprep.subr.mxu0 0.0
    %123 = vmatpush1.msra.mxu0 0.0
    %124 = vmatprep.mubr.f32.mxu0 0.0
    %125 = vmatmul.mubr.f32.gmra.mrb[0].mxu0 %v58
    %v126 = vpop.f32.mrb[0].mxu0
    %v127 = vadd.f32 %v49, %v126
    %v128 = vpop.f32.mrb[0].mxu0
    %v129 = vadd.f32 %v53, %v128
    %130 = vdwg.mxu0
    %v131 = vsub.f32 %v129, 5.0
    %v132 = vmax.f32 %v131, 0.0
    %vm133 = vcmp.ne.f32.partialorder %v131, %v131
    %v134 = vadd.f32 %v131, 0.0
    %v135 = vand.u32 2147483647, %v131
    %v136 = vsub.f32 0.0, %v135
    %v137 = vmul.f32 %v136, 1.442695
    %v138 = vpow.pop %v137
    %v139 = vadd.f32 %v138, 1.0
    %v140 = vlog2.pop %v139
    %v141 = vmul.f32 %v140, 0.6931472
    %v142 = vmul.f32 -0.5, %v138
    %v143 = vadd.f32 %v142, 1.0
    %v144 = vmul.f32 %v143, %v138
    %v145 = vand.u32 2147483647, %v138
    %vm146 = vcmp.lt.f32.partialorder %v145, 0.0004427343
    %v147 = vsel %vm146, %v144, %v141
    %v148 = vadd.f32 %v132, %v147
    %v149 = vsel %vm133, %v134, %v148
    %v150 = vld [vmem:[%s3] sm:$0xff]
    %v151 = vmul.f32 %v149, %v150
    %v152 = vadd.f32 %v127, %v151
    %v153 = vadd.f32 %v127, %v152
    %154 = vst [vmem:[#allocation5] sm:$0xff] %v153
    %v155 = vlog2.pop %v149
    %v156 = vmul.f32 %v155, 0.6931472
    %v157 = vsub.f32 0.0, %v156
    %v158 = vmul.f32 %v149, %v149
    %v159 = vmul.f32 %v127, %v127
    %v160 = vadd.f32 %v158, %v159
    %v161 = vsub.f32 %v160, 1.0
    %v162 = vmul.f32 %v161, 0.5
    %v163 = vadd.f32 %v157, %v162
    %164 = vadd.xlane.f32.xlu0 %v163
    %v165 = vpop.xlane.xlu0 %164
    %v166 = vrot.slane %v165, 4
    %v167 = vadd.f32 %v165, %v166
    %v168 = vrot.slane %v167, 2
    %v169 = vadd.f32 %v167, %v168
    %v170 = vrot.slane %v169, 1
    %v171 = vadd.f32 %v169, %v170
    %s172 = vtos %v171
    %v173 = vstv %s172
    %vm174 = vcmask 0
    %175 = vst.msk [vmem:[#allocation6] sm:$0x1] %vm174, %v173
    // Predicated region
    $region22: #{vib_forward.1} parent=1 // pred_check
      _
    $region23: #{vib_forward.1} parent=1 // pred_check_branch
      %177 = sbr.rel (0) target = $region25
    $region24: #{vib_forward.1} parent=1 // pred_region
      %s179 = ssub.s32 128, 128
      %180 = vsyncadd [#allocation4], %s179
      %s182 = sshll.u32 [#allocation5], 4
      %s183 = int_to_ptr.vmem [resolvable:$true] %s182
      %185 = dma.vmem_to_hbm [thread:$0]  %s183, 128, %s4, [#allocation4]
    $region25: #{vib_forward.1} parent=1 // pred_fallthru
      _
    // Predicated region
    $region26: #{vib_forward.1} parent=1 // pred_check
      _
    $region27: #{vib_forward.1} parent=1 // pred_check_branch
      %187 = sbr.rel (0) target = $region29
    $region28: #{vib_forward.1} parent=1 // pred_region
      %s189 = ssub.s32 16, 16
      %190 = vsyncadd [#allocation7], %s189
      %s192 = sshll.u32 [#allocation6], 4
      %s193 = int_to_ptr.vmem [resolvable:$true] %s192
      %195 = dma.vmem_to_hbm [thread:$0]  %s193, 16, %s5, [#allocation7]
    $region29: #{vib_forward.1} parent=1 // pred_fallthru
      _
    // Predicated region
    $region30: #{vib_forward.1} parent=1 // pred_check
      _
    $region31: #{vib_forward.1} parent=1 // pred_check_branch
      %197 = sbr.rel (0) target = $region33
    $region32: #{vib_forward.1} parent=1 // pred_region
      %198 = dma.done [#allocation4], 128
    $region33: #{vib_forward.1} parent=1 // pred_fallthru
      _
    // Predicated region
    $region34: #{vib_forward.1} parent=1 // pred_check
      _
    $region35: #{vib_forward.1} parent=1 // pred_check_branch
      %200 = sbr.rel (0) target = $region37
    $region36: #{vib_forward.1} parent=1 // pred_region
      %201 = dma.done [#allocation7], 16
    $region37: #{vib_forward.1} parent=1 // pred_fallthru
      _
    %202 = vsyncpa [#allocation3], 1
    %203 = vsyncpa [#allocation4], 1
    %204 = vsyncpa [#allocation7], 1

</llo_original>
